<compile_context>
chip_gen: v6e
topology: v6e:2x2x1
jax: 0.10.0
libtpu: 0.0.40
codegen_flags: <defaults>
</compile_context>

<pallas_src>
import functools

import jax
import jax.numpy as jnp
from jax.experimental import pallas as pl
from jax.experimental.pallas import tpu as pltpu

LANES = 128
SUBLANES = 8
PAD_ELEMS = SUBLANES * LANES   # pad granularity: one full (8, 128) f32 vreg


@functools.lru_cache(maxsize=1)
def _tpu_defaults():
    """(num_cores, max_tile_rows, vmem_limit_bytes) for the local TPU generation.

    Tile budgets count 2 inputs x 2 pipeline buffers plus compute
    intermediates (f32 casts / sigmoid / product live in VMEM too), so the
    scoped-VMEM limits below leave comfortable headroom on each chip.
    """
    kind = ""
    try:
        kind = jax.devices()[0].device_kind.lower()
    except Exception:
        pass
    if "v7" in kind:                                   # 2 TC/chip, 64 MiB VMEM
        return 2, 8192, 48 * 1024 * 1024
    if "v6" in kind:                                   # 1 TC, 128 MiB VMEM
        return 1, 8192, 96 * 1024 * 1024
    if "v5" in kind and ("lite" in kind or "v5e" in kind):   # v5e, 128 MiB VMEM
        return 1, 4096, 64 * 1024 * 1024
    # Unknown chip: conservative 1 MiB tiles, default scoped VMEM limit.
    return 1, 2048, None


def _dice_kernel(x_ref, t_ref, out_ref, acc_ref, *,
                 tile_rows, tiles_per_core, num_tiles, rows,
                 tail_mask, has_phantom):
    """Grid = (num_cores, tiles_per_core); reduction axis (j) is last.

    acc_ref is a (3, 8, 128) f32 VMEM accumulator:
      acc[0] -> lane/sublane partials of sum(sigmoid(x) * t)
      acc[1] -> partials of sum(sigmoid(x))
      acc[2] -> partials of sum(t)
    Each core writes its accumulator once, at its last grid step, to its own
    lane-dense (3, 8, 128) output slab; the final reduce is done in JAX.
    """
    c = pl.program_id(0)
    j = pl.program_id(1)
    tile_id = c * tiles_per_core + j

    @pl.when(j == 0)
    def _():
        acc_ref[...] = jnp.zeros_like(acc_ref)

    def accumulate(s_val, t_val):
        # (tile_rows, 128) -> (tile_rows//8, 8, 128) aligns exactly with vreg
        # tiles (free view); the axis-0 sums are pure full-vreg VPU adds.
        s3 = s_val.reshape(tile_rows // SUBLANES, SUBLANES, LANES)
        t3 = t_val.reshape(tile_rows // SUBLANES, SUBLANES, LANES)
        acc_ref[0] += jnp.sum(s3 * t3, axis=0)
        acc_ref[1] += jnp.sum(s3, axis=0)
        acc_ref[2] += jnp.sum(t3, axis=0)

    def body():
        x = x_ref[...].astype(jnp.float32)
        t = t_ref[...].astype(jnp.float32)
        # sigmoid(x) == 0.5 * (tanh(x/2) + 1): one EUP push per vreg (vs
        # exp + reciprocal/div).  tanh(-inf) == -1, so the -inf pad sentinel
        # still contributes exactly 0 to every sum.
        s = 0.5 * jnp.tanh(0.5 * x) + 0.5

        if tail_mask:
            # Only the single row-partial tile pays the iota/compare/select.
            is_tail = tile_id == num_tiles - 1

            @pl.when(jnp.logical_not(is_tail))
            def _():
                accumulate(s, t)

            @pl.when(is_tail)
            def _():
                # int32 row ids: safe for n < ~2.7e11 elements.
                row_ids = (jax.lax.broadcasted_iota(
                    jnp.int32, (tile_rows, LANES), 0) + tile_id * tile_rows)
                valid = row_ids < rows
                accumulate(jnp.where(valid, s, 0.0), jnp.where(valid, t, 0.0))
        else:
            accumulate(s, t)

    if has_phantom:
        # A clamped phantom tile (per-core split over-covering num_tiles) still
        # costs its DMA, but all of its compute is skipped at runtime.
        pl.when(tile_id < num_tiles)(body)
    else:
        body()

    @pl.when(j == pl.num_programs(1) - 1)
    def _():
        out_ref[...] = acc_ref[...]


def dice_loss(inputs, targets, smooth=1.0):
    """Pallas equivalent of DiceLoss.forward(inputs, targets, smooth)."""
    n = inputs.size
    assert targets.size == n and n > 0

    x = inputs.reshape(-1)
    t = targets.reshape(-1)

    # Caller contract: the kernel is HBM-bound, so passing 0/1 targets as
    # int8/bf16 (not f32) cuts the streamed bytes; bool is shrunk here.
    if t.dtype == jnp.bool_:
        t = t.astype(jnp.int8)

    rem = n % PAD_ELEMS
    if rem:
        # Rare ragged tail: pad in native dtype (no upcast copy) with a
        # sentinel so sigmoid(pad) == 0 and t_pad == 0 contribute nothing.
        pad = PAD_ELEMS - rem
        if not jnp.issubdtype(x.dtype, jnp.floating):
            x = x.astype(jnp.float32)
        x = jnp.pad(x, (0, pad), constant_values=-jnp.inf)
        t = jnp.pad(t, (0, pad), constant_values=0)

    rows = x.size // LANES            # multiple of 8 by construction
    x = x.reshape(rows, LANES)        # free for contiguous data
    t = t.reshape(rows, LANES)

    num_cores, max_tile_rows, vmem_limit = _tpu_defaults()
    tile_rows = min(max_tile_rows, rows)
    num_tiles = pl.cdiv(rows, tile_rows)
    tiles_per_core = pl.cdiv(num_tiles, num_cores)
    tail_mask = (rows % tile_rows) != 0
    has_phantom = num_cores * tiles_per_core != num_tiles

    def in_map(c, j):
        # Clamp phantom tiles so their DMA stays in bounds; their compute is
        # skipped inside the kernel.
        return (jnp.minimum(c * tiles_per_core + j, num_tiles - 1), 0)

    tile_spec = pl.BlockSpec((tile_rows, LANES), in_map)

    if num_cores > 1:
        # v7x: make the size-2 leading axis really shard across the two
        # TensorCores (plain "parallel" is near-neutral for codegen).
        lead_sem = getattr(pltpu, "CORE_PARALLEL", pltpu.PARALLEL)
        dim_sems = (lead_sem, pltpu.ARBITRARY)
    else:
        dim_sems = (pltpu.ARBITRARY, pltpu.ARBITRARY)

    compiler_kwargs = dict(dimension_semantics=dim_sems)
    if vmem_limit is not None:
        compiler_kwargs["vmem_limit_bytes"] = vmem_limit

    partials = pl.pallas_call(
        functools.partial(
            _dice_kernel,
            tile_rows=tile_rows,
            tiles_per_core=tiles_per_core,
            num_tiles=num_tiles,
            rows=rows,
            tail_mask=tail_mask,
            has_phantom=has_phantom,
        ),
        out_shape=jax.ShapeDtypeStruct((num_cores, 3, SUBLANES, LANES),
                                       jnp.float32),
        grid_spec=pltpu.PrefetchScalarGridSpec(
            num_scalar_prefetch=0,
            grid=(num_cores, tiles_per_core),
            in_specs=[tile_spec, tile_spec],
            out_specs=pl.BlockSpec((None, 3, SUBLANES, LANES),
                                   lambda c, j: (c, 0, 0, 0)),
            scratch_shapes=[pltpu.VMEM((3, SUBLANES, LANES), jnp.float32)],
        ),
        compiler_params=pltpu.CompilerParams(**compiler_kwargs),
    )(x, t)

    # Tiny epilogue in plain JAX: combine per-core lane/sublane partials.
    sums = jnp.sum(partials, axis=(0, 2, 3))        # (3,)
    intersection, inputs_sum, targets_sum = sums[0], sums[1], sums[2]
    dice = (2.0 * intersection + smooth) / (inputs_sum + targets_sum + smooth)
    return 1.0 - dice


if __name__ == "__main__":
    key = jax.random.PRNGKey(0)
    k_in, k_tg = jax.random.split(key)

    # NCHW-style shapes consistent with a segmentation logit/target pair.
    inputs = jax.random.normal(k_in, (2, 4, 16, 16), dtype=jnp.float32)
    targets = (jax.random.uniform(k_tg, (2, 4, 16, 16)) > 0.5).astype(jnp.float32)

    loss = jax.block_until_ready(dice_loss(inputs, targets, smooth=1.0))

    # Pure-JAX reference check (same semantics as the PyTorch forward).
    s = jax.nn.sigmoid(inputs).reshape(-1)
    tg = targets.reshape(-1)
    inter = jnp.sum(s * tg)
    ref = 1.0 - (2.0 * inter + 1.0) / (jnp.sum(s) + jnp.sum(tg) + 1.0)
    assert jnp.allclose(loss, ref, rtol=1e-5, atol=1e-5), (loss, ref)

    print("KERNEL_OK")
</pallas_src>

<mosaic_0001>
module attributes {stable_mosaic.version = 11 : i64} {
  func.func @_dice_kernel(%arg0: i32, %arg1: i32, %arg2: memref<16x128xf32, #tpu.memory_space<vmem>>, %arg3: memref<16x128xf32, #tpu.memory_space<vmem>>, %arg4: memref<1x3x8x128xf32, #tpu.memory_space<vmem>>, %arg5: memref<3x8x128xf32, #tpu.memory_space<vmem>>) attributes {dimension_semantics = [#tpu.dimension_semantics<arbitrary>, #tpu.dimension_semantics<arbitrary>], iteration_bounds = array<i64: 1, 1>, scalar_prefetch = 0 : i64, scratch_operands = 1 : i64, tpu.core_type = #tpu.core_type<tc>, window_params = [{transform_indices = @transform_0, window_bounds = array<i64: 16, 128>}, {transform_indices = @transform_1, window_bounds = array<i64: 16, 128>}, {transform_indices = @transform_2, window_bounds = array<i64: 1, 3, 8, 128>}]} {
    %c0_i32 = arith.constant 0 : i32
    %0 = arith.cmpi eq, %arg1, %c0_i32 : i32
    %1 = arith.extui %0 : i1 to i32
    %c0_i32_0 = arith.constant 0 : i32
    %2 = arith.cmpi ne, %1, %c0_i32_0 : i32
    scf.if %2 {
      %cst_27 = arith.constant 0.000000e+00 : f32
      %39 = vector.broadcast %cst_27 : f32 to vector<3x8x128xf32>
      %c0_28 = arith.constant 0 : index
      %c0_29 = arith.constant 0 : index
      %c0_30 = arith.constant 0 : index
      %40 = vector.load %arg5[%c0_28, %c0_29, %c0_30] : memref<3x8x128xf32, #tpu.memory_space<vmem>>, vector<3x8x128xf32>
      tpu.vector_store %arg5[%c0_28, %c0_29, %c0_30], %39 {strides = array<i32>} : memref<3x8x128xf32, #tpu.memory_space<vmem>>, vector<3x8x128xf32>,
    } else {
    }
    %c0 = arith.constant 0 : index
    %c0_1 = arith.constant 0 : index
    %3 = vector.load %arg2[%c0, %c0_1] : memref<16x128xf32, #tpu.memory_space<vmem>>, vector<16x128xf32>
    %c0_2 = arith.constant 0 : index
    %c0_3 = arith.constant 0 : index
    %4 = vector.load %arg3[%c0_2, %c0_3] : memref<16x128xf32, #tpu.memory_space<vmem>>, vector<16x128xf32>
    %cst = arith.constant 5.000000e-01 : f32
    %5 = vector.broadcast %cst : f32 to vector<16x128xf32>
    %6 = arith.mulf %5, %3 : vector<16x128xf32>
    %7 = math.tanh %6 : vector<16x128xf32>
    %cst_4 = arith.constant 5.000000e-01 : f32
    %8 = vector.broadcast %cst_4 : f32 to vector<16x128xf32>
    %9 = arith.mulf %8, %7 : vector<16x128xf32>
    %cst_5 = arith.constant 5.000000e-01 : f32
    %10 = vector.broadcast %cst_5 : f32 to vector<16x128xf32>
    %11 = arith.addf %9, %10 : vector<16x128xf32>
    %12 = vector.shape_cast %11 : vector<16x128xf32> to vector<2x8x128xf32>
    %13 = vector.shape_cast %4 : vector<16x128xf32> to vector<2x8x128xf32>
    %c0_6 = arith.constant 0 : index
    %c0_7 = arith.constant 0 : index
    %c0_8 = arith.constant 0 : index
    %14 = vector.load %arg5[%c0_6, %c0_7, %c0_8] : memref<3x8x128xf32, #tpu.memory_space<vmem>>, vector<1x8x128xf32>
    %15 = vector.shape_cast %14 : vector<1x8x128xf32> to vector<8x128xf32>
    %16 = arith.mulf %12, %13 : vector<2x8x128xf32>
    %cst_9 = arith.constant dense<0.000000e+00> : vector<8x128xf32>
    %17 = vector.multi_reduction <add>, %16, %cst_9 [0] : vector<2x8x128xf32> to vector<8x128xf32>
    %18 = arith.addf %15, %17 : vector<8x128xf32>
    %c0_10 = arith.constant 0 : index
    %c0_11 = arith.constant 0 : index
    %c0_12 = arith.constant 0 : index
    %19 = vector.load %arg5[%c0_10, %c0_11, %c0_12] : memref<3x8x128xf32, #tpu.memory_space<vmem>>, vector<1x8x128xf32>
    %20 = vector.shape_cast %19 : vector<1x8x128xf32> to vector<8x128xf32>
    %21 = vector.shape_cast %18 : vector<8x128xf32> to vector<1x8x128xf32>
    tpu.vector_store %arg5[%c0_10, %c0_11, %c0_12], %21 {strides = array<i32>} : memref<3x8x128xf32, #tpu.memory_space<vmem>>, vector<1x8x128xf32>,
    %c1 = arith.constant 1 : index
    %c0_13 = arith.constant 0 : index
    %c0_14 = arith.constant 0 : index
    %22 = vector.load %arg5[%c1, %c0_13, %c0_14] : memref<3x8x128xf32, #tpu.memory_space<vmem>>, vector<1x8x128xf32>
    %23 = vector.shape_cast %22 : vector<1x8x128xf32> to vector<8x128xf32>
    %cst_15 = arith.constant dense<0.000000e+00> : vector<8x128xf32>
    %24 = vector.multi_reduction <add>, %12, %cst_15 [0] : vector<2x8x128xf32> to vector<8x128xf32>
    %25 = arith.addf %23, %24 : vector<8x128xf32>
    %c1_16 = arith.constant 1 : index
    %c0_17 = arith.constant 0 : index
    %c0_18 = arith.constant 0 : index
    %26 = vector.load %arg5[%c1_16, %c0_17, %c0_18] : memref<3x8x128xf32, #tpu.memory_space<vmem>>, vector<1x8x128xf32>
    %27 = vector.shape_cast %26 : vector<1x8x128xf32> to vector<8x128xf32>
    %28 = vector.shape_cast %25 : vector<8x128xf32> to vector<1x8x128xf32>
    tpu.vector_store %arg5[%c1_16, %c0_17, %c0_18], %28 {strides = array<i32>} : memref<3x8x128xf32, #tpu.memory_space<vmem>>, vector<1x8x128xf32>,
    %c2 = arith.constant 2 : index
    %c0_19 = arith.constant 0 : index
    %c0_20 = arith.constant 0 : index
    %29 = vector.load %arg5[%c2, %c0_19, %c0_20] : memref<3x8x128xf32, #tpu.memory_space<vmem>>, vector<1x8x128xf32>
    %30 = vector.shape_cast %29 : vector<1x8x128xf32> to vector<8x128xf32>
    %cst_21 = arith.constant dense<0.000000e+00> : vector<8x128xf32>
    %31 = vector.multi_reduction <add>, %13, %cst_21 [0] : vector<2x8x128xf32> to vector<8x128xf32>
    %32 = arith.addf %30, %31 : vector<8x128xf32>
    %c2_22 = arith.constant 2 : index
    %c0_23 = arith.constant 0 : index
    %c0_24 = arith.constant 0 : index
    %33 = vector.load %arg5[%c2_22, %c0_23, %c0_24] : memref<3x8x128xf32, #tpu.memory_space<vmem>>, vector<1x8x128xf32>
    %34 = vector.shape_cast %33 : vector<1x8x128xf32> to vector<8x128xf32>
    %35 = vector.shape_cast %32 : vector<8x128xf32> to vector<1x8x128xf32>
    tpu.vector_store %arg5[%c2_22, %c0_23, %c0_24], %35 {strides = array<i32>} : memref<3x8x128xf32, #tpu.memory_space<vmem>>, vector<1x8x128xf32>,
    %c0_i32_25 = arith.constant 0 : i32
    %36 = arith.cmpi eq, %arg1, %c0_i32_25 : i32
    %37 = arith.extui %36 : i1 to i32
    %c0_i32_26 = arith.constant 0 : i32
    %38 = arith.cmpi ne, %37, %c0_i32_26 : i32
    scf.if %38 {
      %c0_27 = arith.constant 0 : index
      %c0_28 = arith.constant 0 : index
      %c0_29 = arith.constant 0 : index
      %39 = vector.load %arg5[%c0_27, %c0_28, %c0_29] : memref<3x8x128xf32, #tpu.memory_space<vmem>>, vector<3x8x128xf32>
      %c0_30 = arith.constant 0 : index
      %c0_31 = arith.constant 0 : index
      %c0_32 = arith.constant 0 : index
      %c0_33 = arith.constant 0 : index
      %40 = vector.load %arg4[%c0_30, %c0_31, %c0_32, %c0_33] : memref<1x3x8x128xf32, #tpu.memory_space<vmem>>, vector<1x3x8x128xf32>
      %41 = vector.shape_cast %40 : vector<1x3x8x128xf32> to vector<3x8x128xf32>
      %42 = vector.shape_cast %39 : vector<3x8x128xf32> to vector<1x3x8x128xf32>
      tpu.vector_store %arg4[%c0_30, %c0_31, %c0_32, %c0_33], %42 {strides = array<i32>} : memref<1x3x8x128xf32, #tpu.memory_space<vmem>>, vector<1x3x8x128xf32>,
    } else {
    }
    return
  }
  func.func @transform_0(%arg0: i32, %arg1: i32) -> (i32, i32) {
    %c1_i32 = arith.constant 1 : i32
    %0 = arith.muli %arg0, %c1_i32 : i32
    %1 = arith.addi %0, %arg1 : i32
    %c0_i32 = arith.constant 0 : i32
    %2 = arith.minsi %1, %c0_i32 : i32
    %c0_i32_0 = arith.constant 0 : i32
    %c0_i32_1 = arith.constant 0 : i32
    return %2, %c0_i32_0 : i32, i32
  }
  func.func @transform_1(%arg0: i32, %arg1: i32) -> (i32, i32) {
    %c1_i32 = arith.constant 1 : i32
    %0 = arith.muli %arg0, %c1_i32 : i32
    %1 = arith.addi %0, %arg1 : i32
    %c0_i32 = arith.constant 0 : i32
    %2 = arith.minsi %1, %c0_i32 : i32
    %c0_i32_0 = arith.constant 0 : i32
    %c0_i32_1 = arith.constant 0 : i32
    return %2, %c0_i32_0 : i32, i32
  }
  func.func @transform_2(%arg0: i32, %arg1: i32) -> (i32, i32, i32, i32) {
    %c0_i32 = arith.constant 0 : i32
    %c0_i32_0 = arith.constant 0 : i32
    %c0_i32_1 = arith.constant 0 : i32
    %c0_i32_2 = arith.constant 0 : i32
    return %arg0, %c0_i32, %c0_i32_0, %c0_i32_1 : i32, i32, i32, i32
  }
}

</mosaic_0001>

<llo_original>
// kernel: tpu_custom_call.1
$region0: #{tpu_custom_call.1}
  #allocation0 [shape = 'u32[]', space=smem, size = 0x4, offset = 0x4, fixed_abs, tag = 'smem constant byte address 0x4 - core index']
  #allocation1 [shape = 'u32[144,128]{1,0:T(1,128)}', space=vmem, size = 0x12000, scoped, tag = 'internal scratch']
  #allocation2 [shape = 'f32[3,8,128]{2,1,0:T(8,128)}', space=vmem, size = 0x3000, scoped, tag = 'scratch operand']
  %s0 = inlined_call_operand.hbm [shape: f32[16,128], index: 0, kind: input, shape index: {}]
  %s1 = inlined_call_operand.hbm [shape: f32[16,128], index: 1, kind: input, shape index: {}]
  %s2 = inlined_call_operand.hbm [shape: f32[1,3,8,128], index: 2, kind: output, shape index: {}]
  %s3 = sld [smem:[#allocation0]]
  $region34: #{tpu_custom_call.1} parent=0
    _
  %s5 = ssub.s32 1, %s3
  %s6 = scalar_select 0, %s5, %s3
  $region1: #{tpu_custom_call.1} parent=0
    #allocation3 [shape = 'u8[8192]{0}', space=vmem, size = 0x2000, scoped, tag = 'input window, operand 0, single buffered']
    #allocation4 [shape = 's32[1]{0}', space=sflag, size = 0x4, scoped, tag = 'scoped memory for tpu_custom_call.1']
    #allocation5 [shape = 's32[1]{0}', space=sflag, size = 0x4, scoped, tag = 'scoped memory for tpu_custom_call.1']
    #allocation6 [shape = 'u8[8192]{0}', space=vmem, size = 0x2000, scoped, tag = 'input window, operand 1, single buffered']
    #allocation7 [shape = 's32[1]{0}', space=sflag, size = 0x4, scoped, tag = 'scoped memory for tpu_custom_call.1']
    #allocation8 [shape = 'u8[12288]{0}', space=vmem, size = 0x3000, scoped, tag = 'output window, operand 0, single buffered']
    %7 = vsyncpa [#allocation4], 0
    %8 = vsyncpa [#allocation7], 0
    %9 = vsyncpa [#allocation5], 0
    // Predicated region
    $region2: #{tpu_custom_call.1} parent=1 // pred_check
      _
    $region3: #{tpu_custom_call.1} parent=1 // pred_check_branch
      %11 = sbr.rel (0) target = $region5
    $region4: #{tpu_custom_call.1} parent=1 // pred_region
      %s12 = sadd.s32 0, 0
      %p13 = scmp.lt.s32.totalorder %s12, 0
      %s14 = scalar_select %p13, %s12, 0
      %s15 = smul.u32 2, %s14
      %s17 = ssub.s32 256, 256
      %18 = vsyncadd [#allocation4], %s17
      %s19 = smul.addr %s15, 128
      %s20 = scalar_lea.hbm %s0, %s19
      %s21 = sshll.u32 [#allocation3], 4
      %s22 = int_to_ptr.vmem [resolvable:$true] %s21
      %27 = dma.hbm_to_vmem [thread:$0]  %s20, 256, %s22, [#allocation4], 128, 128, 8
    $region5: #{tpu_custom_call.1} parent=1 // pred_fallthru
      _
    // Predicated region
    $region6: #{tpu_custom_call.1} parent=1 // pred_check
      _
    $region7: #{tpu_custom_call.1} parent=1 // pred_check_branch
      %29 = sbr.rel (0) target = $region9
    $region8: #{tpu_custom_call.1} parent=1 // pred_region
      %s30 = sadd.s32 0, 0
      %p31 = scmp.lt.s32.totalorder %s30, 0
      %s32 = scalar_select %p31, %s30, 0
      %s33 = smul.u32 2, %s32
      %s35 = ssub.s32 256, 256
      %36 = vsyncadd [#allocation7], %s35
      %s37 = smul.addr %s33, 128
      %s38 = scalar_lea.hbm %s1, %s37
      %s39 = sshll.u32 [#allocation6], 4
      %s40 = int_to_ptr.vmem [resolvable:$true] %s39
      %45 = dma.hbm_to_vmem [thread:$0]  %s38, 256, %s40, [#allocation7], 128, 128, 8
    $region9: #{tpu_custom_call.1} parent=1 // pred_fallthru
      _
    // Predicated region
    $region10: #{tpu_custom_call.1} parent=1 // pred_check
      _
    $region11: #{tpu_custom_call.1} parent=1 // pred_check_branch
      %47 = sbr.rel (0) target = $region13
    $region12: #{tpu_custom_call.1} parent=1 // pred_region
      %48 = dma.done [#allocation4], 256
    $region13: #{tpu_custom_call.1} parent=1 // pred_fallthru
      _
    // Predicated region
    $region14: #{tpu_custom_call.1} parent=1 // pred_check
      _
    $region15: #{tpu_custom_call.1} parent=1 // pred_check_branch
      %50 = sbr.rel (0) target = $region17
    $region16: #{tpu_custom_call.1} parent=1 // pred_region
      %51 = dma.done [#allocation7], 256
    $region17: #{tpu_custom_call.1} parent=1 // pred_fallthru
      _
    %s52 = sadd.s32 0, 0
    %p53 = scmp.lt.s32.totalorder %s52, 0
    %s54 = scalar_select %p53, %s52, 0
    %s55 = smul.u32 2, %s54
    %s56 = sadd.s32 0, 0
    %p57 = scmp.lt.s32.totalorder %s56, 0
    %s58 = scalar_select %p57, %s56, 0
    %s59 = smul.u32 2, %s58
    %p60 = scmp.eq.s32.totalorder 0, 0
    // Predicated region
    $region18: #{tpu_custom_call.1} parent=1 // pred_check
      %p61 = pneg %p60
    $region19: #{tpu_custom_call.1} parent=1 // pred_check_branch
      %63 = sbr.rel (%p61) target = $region21
    $region20: #{tpu_custom_call.1} parent=1 // pred_region
      %64 = vst [vmem:[#allocation2] sm:$0xff] 0.0
      %65 = vst [vmem:[#allocation2 + $0x8] sm:$0xff] 0.0
      %66 = vst [vmem:[#allocation2 + $0x10] sm:$0xff] 0.0
    $region21: #{tpu_custom_call.1} parent=1 // pred_fallthru
      _
    %v67 = vld [vmem:[#allocation3] sm:$0xff]
    %v68 = vld [vmem:[#allocation3 + $0x8] sm:$0xff]
    %v69 = vld [vmem:[#allocation6] sm:$0xff]
    %v70 = vld [vmem:[#allocation6 + $0x8] sm:$0xff]
    %v71 = vmul.f32 %v67, 0.5
    %v72 = vmul.f32 %v68, 0.5
    %v73 = vtanh.pop %v71
    %v74 = vtanh.pop %v72
    %v75 = vmul.f32 %v73, 0.5
    %v76 = vmul.f32 %v74, 0.5
    %v77 = vadd.f32 %v75, 0.5
    %v78 = vadd.f32 %v76, 0.5
    %v79 = vld [vmem:[#allocation2] sm:$0xff]
    %v80 = vmul.f32 %v77, %v69
    %v81 = vmul.f32 %v78, %v70
    %v82 = vadd.f32 %v80, %v81
    %v83 = vadd.f32 %v79, %v82
    %84 = vst [vmem:[#allocation2] sm:$0xff] %v83
    %s85 = scalar_lea.vmem [#allocation2], 8
    %v86 = vld [vmem:[%s85] sm:$0xff]
    %v87 = vadd.f32 %v77, %v78
    %v88 = vadd.f32 %v86, %v87
    %89 = vst [vmem:[%s85] sm:$0xff] %v88
    %s90 = scalar_lea.vmem [#allocation2], 16
    %v91 = vld [vmem:[%s90] sm:$0xff]
    %v92 = vadd.f32 %v69, %v70
    %v93 = vadd.f32 %v91, %v92
    %94 = vst [vmem:[%s90] sm:$0xff] %v93
    // Predicated region
    $region22: #{tpu_custom_call.1} parent=1 // pred_check
      %p95 = pneg %p60
    $region23: #{tpu_custom_call.1} parent=1 // pred_check_branch
      %97 = sbr.rel (%p95) target = $region25
    $region24: #{tpu_custom_call.1} parent=1 // pred_region
      %v98 = vld [vmem:[#allocation2] sm:$0xff]
      %v99 = vld [vmem:[#allocation2 + $0x8] sm:$0xff]
      %v100 = vld [vmem:[#allocation2 + $0x10] sm:$0xff]
      %101 = vst [vmem:[#allocation8] sm:$0xff] %v98
      %102 = vst [vmem:[#allocation8 + $0x8] sm:$0xff] %v99
      %103 = vst [vmem:[#allocation8 + $0x10] sm:$0xff] %v100
    $region25: #{tpu_custom_call.1} parent=1 // pred_fallthru
      _
    // Predicated region
    $region26: #{tpu_custom_call.1} parent=1 // pred_check
      _
    $region27: #{tpu_custom_call.1} parent=1 // pred_check_branch
      %105 = sbr.rel (0) target = $region29
    $region28: #{tpu_custom_call.1} parent=1 // pred_region
      %s107 = ssub.s32 384, 384
      %108 = vsyncadd [#allocation5], %s107
      %s109 = sshll.u32 [#allocation8], 4
      %s110 = int_to_ptr.vmem [resolvable:$true] %s109
      %115 = dma.vmem_to_hbm [thread:$0]  %s110, 384, %s2, [#allocation5], 128, 128, 8
    $region29: #{tpu_custom_call.1} parent=1 // pred_fallthru
      _
    // Predicated region
    $region30: #{tpu_custom_call.1} parent=1 // pred_check
      _
    $region31: #{tpu_custom_call.1} parent=1 // pred_check_branch
      %117 = sbr.rel (0) target = $region33
    $region32: #{tpu_custom_call.1} parent=1 // pred_region
      %118 = dma.done [#allocation5], 384
    $region33: #{tpu_custom_call.1} parent=1 // pred_fallthru
      _
    %119 = vsyncpa [#allocation4], 1
    %120 = vsyncpa [#allocation7], 1
    %121 = vsyncpa [#allocation5], 1

</llo_original>
